<compile_context>
chip_gen: v5e
topology: v5e:2x2
jax: 0.10.0
libtpu: 0.0.40
codegen_flags: <defaults>
</compile_context>

<pallas_src>
import jax
import jax.numpy as jnp
from jax.experimental import pallas as pl
from jax.experimental.pallas import tpu as pltpu

_LANES = 128


def _swish_kernel(x_ref, o_ref):
    x = x_ref[...]
    xf = x.astype(jnp.float32)
    sig = jax.nn.sigmoid(xf)          # EUP transcendental, f32
    o_ref[...] = (xf * sig).astype(o_ref.dtype)


def swish(x, *, tile_rows=2048):
    """Elementwise Swish: x * sigmoid(x), matching Swish_func.forward."""
    orig_shape = x.shape
    orig_dtype = x.dtype

    n = x.size
    rows = pl.cdiv(n, _LANES)
    n_flat = rows * _LANES

    x_flat = jnp.ravel(x)
    if n_flat != n:
        # Only pad the ragged tail up to one lane-row (<= 127 elements);
        # swish(0) == 0 and the tail is sliced away below.
        x_flat = jnp.pad(x_flat, (0, n_flat - n))
    x2d = x_flat.reshape(rows, _LANES)

    # Block: full array if it fits in one tile, otherwise (tile_rows, 128)
    # with Pallas masking the partial last block.
    block_rows = rows if rows <= tile_rows else tile_rows
    grid = (pl.cdiv(rows, block_rows),)

    out2d = pl.pallas_call(
        _swish_kernel,
        out_shape=jax.ShapeDtypeStruct((rows, _LANES), orig_dtype),
        grid_spec=pltpu.PrefetchScalarGridSpec(
            num_scalar_prefetch=0,
            grid=grid,
            in_specs=[pl.BlockSpec((block_rows, _LANES), lambda i: (i, 0))],
            out_specs=pl.BlockSpec((block_rows, _LANES), lambda i: (i, 0)),
        ),
        compiler_params=pltpu.CompilerParams(
            dimension_semantics=("parallel",)),
    )(x2d)

    if n_flat != n:
        out_flat = out2d.reshape(n_flat)[:n]
        return out_flat.reshape(orig_shape)
    return out2d.reshape(orig_shape)


if __name__ == "__main__":
    key = jax.random.PRNGKey(0)
    # NCHW activation tensor consistent with the module's usage.
    x = jax.random.normal(key, (2, 4, 16, 16), dtype=jnp.float32)

    y = swish(x)
    jax.block_until_ready(y)

    # correctness check against pure-JAX reference
    y_ref = x * jax.nn.sigmoid(x)
    assert y.shape == x.shape and y.dtype == x.dtype
    assert jnp.allclose(y, y_ref, atol=1e-6, rtol=1e-6)

    # also exercise a shape that is NOT a multiple of 128 and a bf16 input
    x2 = jax.random.normal(jax.random.PRNGKey(1), (3, 5, 7), dtype=jnp.bfloat16)
    y2 = swish(x2)
    jax.block_until_ready(y2)
    y2_ref = (x2.astype(jnp.float32) * jax.nn.sigmoid(x2.astype(jnp.float32))
              ).astype(jnp.bfloat16)
    assert y2.shape == x2.shape and y2.dtype == x2.dtype
    assert jnp.allclose(y2.astype(jnp.float32), y2_ref.astype(jnp.float32),
                        atol=1e-2, rtol=1e-2)

    print("KERNEL_OK")
</pallas_src>

<mosaic_0001>
module attributes {stable_mosaic.version = 11 : i64} {
  func.func @_swish_kernel(%arg0: i32, %arg1: memref<16x128xf32, #tpu.memory_space<vmem>>, %arg2: memref<16x128xf32, #tpu.memory_space<vmem>>) attributes {dimension_semantics = [#tpu.dimension_semantics<parallel>], iteration_bounds = array<i64: 1>, scalar_prefetch = 0 : i64, scratch_operands = 0 : i64, tpu.core_type = #tpu.core_type<tc>, window_params = [{transform_indices = @transform_0, window_bounds = array<i64: 16, 128>}, {transform_indices = @transform_1, window_bounds = array<i64: 16, 128>}]} {
    %c0 = arith.constant 0 : index
    %c0_0 = arith.constant 0 : index
    %0 = vector.load %arg1[%c0, %c0_0] : memref<16x128xf32, #tpu.memory_space<vmem>>, vector<16x128xf32>
    %1 = arith.negf %0 : vector<16x128xf32>
    %2 = math.exp %1 : vector<16x128xf32>
    %cst = arith.constant 1.000000e+00 : f32
    %3 = vector.broadcast %cst : f32 to vector<16x128xf32>
    %4 = arith.addf %3, %2 : vector<16x128xf32>
    %5 = arith.divf %3, %4 : vector<16x128xf32>
    %6 = arith.mulf %0, %5 : vector<16x128xf32>
    %c0_1 = arith.constant 0 : index
    %c0_2 = arith.constant 0 : index
    %7 = vector.load %arg2[%c0_1, %c0_2] : memref<16x128xf32, #tpu.memory_space<vmem>>, vector<16x128xf32>
    tpu.vector_store %arg2[%c0_1, %c0_2], %6 {strides = array<i32>} : memref<16x128xf32, #tpu.memory_space<vmem>>, vector<16x128xf32>,
    return
  }
  func.func @transform_0(%arg0: i32) -> (i32, i32) {
    %c0_i32 = arith.constant 0 : i32
    %c0_i32_0 = arith.constant 0 : i32
    return %arg0, %c0_i32 : i32, i32
  }
  func.func @transform_1(%arg0: i32) -> (i32, i32) {
    %c0_i32 = arith.constant 0 : i32
    %c0_i32_0 = arith.constant 0 : i32
    return %arg0, %c0_i32 : i32, i32
  }
}

</mosaic_0001>

<llo_original>
// kernel: tpu_custom_call.1
$region0: #{tpu_custom_call.1}
  #allocation0 [shape = 'u32[]', space=smem, size = 0x4, offset = 0x4, fixed_abs, tag = 'smem constant byte address 0x4 - core index']
  #allocation1 [shape = 'u32[72,128]{1,0:T(1,128)}', space=vmem, size = 0x9000, scoped, tag = 'internal scratch']
  %s0 = inlined_call_operand.hbm [shape: f32[16,128], index: 0, kind: input, shape index: {}]
  %s1 = inlined_call_operand.hbm [shape: f32[16,128], index: 1, kind: output, shape index: {}]
  %s2 = sld [smem:[#allocation0]]
  $region18: #{tpu_custom_call.1} parent=0
    _
  %s4 = ssub.s32 1, %s2
  %s5 = scalar_select 0, %s4, %s2
  $region1: #{tpu_custom_call.1} parent=0
    #allocation2 [shape = 'u8[8192]{0}', space=vmem, size = 0x2000, scoped, tag = 'input window, operand 0, single buffered']
    #allocation3 [shape = 's32[1]{0}', space=sflag, size = 0x4, scoped, tag = 'scoped memory for tpu_custom_call.1']
    #allocation4 [shape = 's32[1]{0}', space=sflag, size = 0x4, scoped, tag = 'scoped memory for tpu_custom_call.1']
    #allocation5 [shape = 'u8[8192]{0}', space=vmem, size = 0x2000, scoped, tag = 'output window, operand 0, single buffered']
    %6 = vsyncpa [#allocation3], 0
    %7 = vsyncpa [#allocation4], 0
    // Predicated region
    $region2: #{tpu_custom_call.1} parent=1 // pred_check
      _
    $region3: #{tpu_custom_call.1} parent=1 // pred_check_branch
      %9 = sbr.rel (0) target = $region5
    $region4: #{tpu_custom_call.1} parent=1 // pred_region
      %11 = vsyncadd [#allocation3], 0
      %s12 = sshll.u32 %s0, 4
      %s13 = int_to_ptr.hbm [resolvable:$true] %s12
      %s14 = sshll.u32 [#allocation2], 4
      %s15 = int_to_ptr.vmem [resolvable:$true] %s14
      %20 = dma.hbm_to_vmem [thread:$0]  %s13, 256, %s15, [#allocation3], 128, 128, 8
    $region5: #{tpu_custom_call.1} parent=1 // pred_fallthru
      _
    // Predicated region
    $region6: #{tpu_custom_call.1} parent=1 // pred_check
      _
    $region7: #{tpu_custom_call.1} parent=1 // pred_check_branch
      %22 = sbr.rel (0) target = $region9
    $region8: #{tpu_custom_call.1} parent=1 // pred_region
      %24 = dma.done [#allocation3], 256
    $region9: #{tpu_custom_call.1} parent=1 // pred_fallthru
      _
    %v25 = vld [vmem:[#allocation2] sm:$0xff]
    %v26 = vld [vmem:[#allocation2 + $0x8] sm:$0xff]
    %v27 = vxor.u32 %v25, 2147483648
    %v28 = vxor.u32 %v26, 2147483648
    %v29 = vmul.f32 %v27, 1.442695
    %v30 = vpow.pop %v29
    %v31 = vmul.f32 %v28, 1.442695
    %v32 = vpow.pop %v31
    %v33 = vadd.f32 %v30, 1.0
    %v34 = vadd.f32 %v32, 1.0
    %v35 = vrcp.pop %v33
    %v36 = vmul.f32 %v33, %v35
    %v37 = vsub.f32 1.0, %v36
    %v38 = vmul.f32 %v35, %v37
    %v39 = vadd.f32 %v35, %v38
    %vm40 = vweird.f32 %v33
    %vm41 = vweird.f32 %v35
    %vm42 = vmor %vm40, %vm41
    %v43 = vsel %vm42, %v35, %v39
    %v44 = vand.u32 2147483647, %v33
    %vm45 = vcmp.eq.f32.partialorder %v44, 8.507059e+37
    %v46 = vand.u32 %v33, 2147483648
    %v47 = vor.u32 1.1754944e-38, %v46
    %v48 = vsel %vm45, %v47, %v43
    %v49 = vmul.f32 1.0, %v48
    %v50 = vrcp.pop %v34
    %v51 = vmul.f32 %v34, %v50
    %v52 = vsub.f32 1.0, %v51
    %v53 = vmul.f32 %v50, %v52
    %v54 = vadd.f32 %v50, %v53
    %vm55 = vweird.f32 %v34
    %vm56 = vweird.f32 %v50
    %vm57 = vmor %vm55, %vm56
    %v58 = vsel %vm57, %v50, %v54
    %v59 = vand.u32 2147483647, %v34
    %vm60 = vcmp.eq.f32.partialorder %v59, 8.507059e+37
    %v61 = vand.u32 %v34, 2147483648
    %v62 = vor.u32 1.1754944e-38, %v61
    %v63 = vsel %vm60, %v62, %v58
    %v64 = vmul.f32 1.0, %v63
    %v65 = vmul.f32 %v25, %v49
    %v66 = vmul.f32 %v26, %v64
    %67 = vst [vmem:[#allocation5] sm:$0xff] %v65
    %68 = vst [vmem:[#allocation5 + $0x8] sm:$0xff] %v66
    // Predicated region
    $region10: #{tpu_custom_call.1} parent=1 // pred_check
      _
    $region11: #{tpu_custom_call.1} parent=1 // pred_check_branch
      %70 = sbr.rel (0) target = $region13
    $region12: #{tpu_custom_call.1} parent=1 // pred_region
      %72 = vsyncadd [#allocation4], 0
      %s73 = sshll.u32 [#allocation5], 4
      %s74 = int_to_ptr.vmem [resolvable:$true] %s73
      %s75 = sshll.u32 %s1, 4
      %s76 = int_to_ptr.hbm [resolvable:$true] %s75
      %81 = dma.vmem_to_hbm [thread:$0]  %s74, 256, %s76, [#allocation4], 128, 128, 8
    $region13: #{tpu_custom_call.1} parent=1 // pred_fallthru
      _
    // Predicated region
    $region14: #{tpu_custom_call.1} parent=1 // pred_check
      _
    $region15: #{tpu_custom_call.1} parent=1 // pred_check_branch
      %83 = sbr.rel (0) target = $region17
    $region16: #{tpu_custom_call.1} parent=1 // pred_region
      %85 = dma.done [#allocation4], 256
    $region17: #{tpu_custom_call.1} parent=1 // pred_fallthru
      _
    %86 = vsyncpa [#allocation3], 1
    %87 = vsyncpa [#allocation4], 1

</llo_original>
